<compile_context>
chip_gen: v6e
topology: v6e:2x2x1
jax: 0.10.0
libtpu: 0.0.40
codegen_flags: <defaults>
</compile_context>

<pallas_src>
import jax
import jax.numpy as jnp
from jax import lax
from jax.experimental import pallas as pl
from jax.experimental.pallas import tpu as pltpu


def _attention2_kernel(bb, f1_ref, f2_ref, w1_ref, fhat_ref, att_ref):
    # f1_ref: (bb, L, D), f2_ref: (bb, T, D), w1_ref: (D, D) torch (out, in).
    w1 = w1_ref[...]  # loaded once, reused for all bb batches in this block

    for i in range(bb):  # static unroll over the small batch block
        f1 = f1_ref[i]   # (L, D), input dtype
        f2 = f2_ref[i]   # (T, D), input dtype

        # q = f2 @ W1  (contract f2 feature dim with W1 rows) -> (T, D).
        # Equivalent to feeding fc1's output transposed, but with no transpose
        # and no (L, D) intermediate.
        q = lax.dot_general(
            f2, w1,
            dimension_numbers=(((1,), (0,)), ((), ())),
            preferred_element_type=jnp.float32,
        ).astype(f2.dtype)  # keep MXU operands at input precision

        # logits[t, l] = sum_d q[t, d] * f1[l, d]  -> (T, L), f32 accumulation.
        # NT contraction: MXU consumes the transposed operand via its feed path.
        logits = lax.dot_general(
            q, f1,
            dimension_numbers=(((1,), (1,)), ((), ())),
            preferred_element_type=jnp.float32,
        )

        # Softmax over L, in f32.
        m = jnp.max(logits, axis=-1, keepdims=True)
        e = jnp.exp(logits - m)
        denom = jnp.sum(e, axis=-1, keepdims=True)
        # EUP approximate reciprocal (its own VLIW slot) + one Newton step on
        # the tiny (T, 1) vector -> essentially exact f32 at negligible cost.
        r = pl.reciprocal(denom, approx=True)
        r = r * (2.0 - denom * r)
        att = e * r                                   # (T, L), f32

        # f_hat = att @ f1 -> (T, D), f32 accumulation on the MXU.
        f_hat = lax.dot_general(
            att.astype(f1.dtype), f1,
            dimension_numbers=(((1,), (0,)), ((), ())),
            preferred_element_type=jnp.float32,
        )

        fhat_ref[i] = f_hat.astype(fhat_ref.dtype)
        att_ref[i] = att.astype(att_ref.dtype)


def _pick_batch_block(B: int) -> int:
    # Amortize per-grid-step overhead, but keep >=2 parallel grid steps so
    # both v7x TensorCores (and megacore halves) get work when B allows it.
    if B <= 2:
        return 1
    target = max(1, B // 2)
    for bb in range(target, 0, -1):
        if B % bb == 0:
            return bb
    return 1


def attention_2(feature_1, feature_2, w1, *, batch_block=None,
                att_dtype=jnp.float32):
    """feature_1: (B, L, D), feature_2: (B, T, D), w1: (D, D) [out, in]."""
    B, L, D = feature_1.shape
    Bq, T, V = feature_2.shape
    assert D == V, "dimension of img_feature and q_feature not match"
    assert B == Bq, "batch sizes must match"

    bb = _pick_batch_block(B) if batch_block is None else batch_block
    assert B % bb == 0, "batch_block must divide B"
    grid = (B // bb,)

    in_itm = jnp.dtype(feature_1.dtype).itemsize
    att_itm = jnp.dtype(att_dtype).itemsize
    # Double-buffered per-step block footprint (+ W1, + headroom). The scoped
    # VMEM default (16/32 MiB) is far below physical; set it explicitly but
    # never above v7x's 64 MiB physical VMEM.
    block_bytes = (
        2 * bb * (L * D * in_itm            # feature_1 block
                  + T * D * in_itm          # feature_2 block
                  + T * D * in_itm          # f_hat block
                  + T * L * att_itm)        # att block
        + 2 * D * D * jnp.dtype(w1.dtype).itemsize)
    vmem_limit = int(min(64 * 1024 * 1024,
                         max(32 * 1024 * 1024, 2 * block_bytes + (4 << 20))))

    def kernel(f1_ref, f2_ref, w1_ref, fhat_ref, att_ref):
        _attention2_kernel(bb, f1_ref, f2_ref, w1_ref, fhat_ref, att_ref)

    grid_spec = pltpu.PrefetchScalarGridSpec(
        num_scalar_prefetch=0,
        grid=grid,
        in_specs=[
            pl.BlockSpec((bb, L, D), lambda b: (b, 0, 0)),  # feature_1 block
            pl.BlockSpec((bb, T, D), lambda b: (b, 0, 0)),  # feature_2 block
            pl.BlockSpec((D, D), lambda b: (0, 0)),         # W1 (shared)
        ],
        out_specs=[
            pl.BlockSpec((bb, T, D), lambda b: (b, 0, 0)),  # f_hat block
            pl.BlockSpec((bb, T, L), lambda b: (b, 0, 0)),  # att block
        ],
    )

    f_hat, att = pl.pallas_call(
        kernel,
        out_shape=(
            jax.ShapeDtypeStruct((B, T, D), feature_1.dtype),
            jax.ShapeDtypeStruct((B, T, L), att_dtype),
        ),
        grid_spec=grid_spec,
        compiler_params=pltpu.CompilerParams(
            dimension_semantics=("parallel",),
            vmem_limit_bytes=vmem_limit,
        ),
    )(feature_1, feature_2, w1)
    return f_hat, att


def reference_attention_2(feature_1, feature_2, w1):
    feat1 = jnp.einsum("bld,ed->ble", feature_1, w1)          # fc1 (no bias)
    logits = jnp.einsum("btd,bld->btl", feature_2, feat1)
    att = jax.nn.softmax(logits, axis=-1)
    f_hat = jnp.einsum("btl,bld->btd", att, feature_1)
    return f_hat, att


def _run_case(key, B, L, T, D, batch_block=None):
    k1, k2, k3 = jax.random.split(key, 3)
    feature_1 = jax.random.normal(k1, (B, L, D), dtype=jnp.float32)
    feature_2 = jax.random.normal(k2, (B, T, D), dtype=jnp.float32)
    # fc1: Linear(D, D, bias=False) -> weight shape (D, D) in (out, in) order.
    w1 = jax.random.normal(k3, (D, D), dtype=jnp.float32) * (1.0 / jnp.sqrt(D))

    f_hat, att = attention_2(feature_1, feature_2, w1, batch_block=batch_block)
    jax.block_until_ready((f_hat, att))

    f_hat_ref, att_ref = reference_attention_2(feature_1, feature_2, w1)
    assert jnp.allclose(f_hat, f_hat_ref, atol=1e-4, rtol=1e-4)
    assert jnp.allclose(att, att_ref, atol=1e-4, rtol=1e-4)


if __name__ == "__main__":
    key = jax.random.PRNGKey(0)
    kA, kB = jax.random.split(key, 2)

    # Harness shapes from the module spec (B=2, L=T=8, D=32): grid=(2,),
    # one parallel step per v7x TensorCore.
    _run_case(kA, B=2, L=8, T=8, D=32)

    # Exercise the batch-blocked path (bb=2, grid=(2,)).
    _run_case(kB, B=4, L=16, T=8, D=32)

    print("KERNEL_OK")
</pallas_src>

<mosaic_0001>
module attributes {stable_mosaic.version = 11 : i64} {
  func.func @kernel(%arg0: i32, %arg1: memref<1x8x32xf32, #tpu.memory_space<vmem>>, %arg2: memref<1x8x32xf32, #tpu.memory_space<vmem>>, %arg3: memref<32x32xf32, #tpu.memory_space<vmem>>, %arg4: memref<1x8x32xf32, #tpu.memory_space<vmem>>, %arg5: memref<1x8x8xf32, #tpu.memory_space<vmem>>) attributes {dimension_semantics = [#tpu.dimension_semantics<parallel>], iteration_bounds = array<i64: 2>, scalar_prefetch = 0 : i64, scratch_operands = 0 : i64, tpu.core_type = #tpu.core_type<tc>, window_params = [{transform_indices = @transform_0, window_bounds = array<i64: 1, 8, 32>}, {transform_indices = @transform_1, window_bounds = array<i64: 1, 8, 32>}, {pipeline_mode = #tpu.pipeline_mode<synchronous>, transform_indices = @transform_2, window_bounds = array<i64: 32, 32>}, {transform_indices = @transform_3, window_bounds = array<i64: 1, 8, 32>}, {transform_indices = @transform_4, window_bounds = array<i64: 1, 8, 8>}]} {
    %c0 = arith.constant 0 : index
    %c0_0 = arith.constant 0 : index
    %0 = vector.load %arg3[%c0, %c0_0] : memref<32x32xf32, #tpu.memory_space<vmem>>, vector<32x32xf32>
    %c0_1 = arith.constant 0 : index
    %c0_2 = arith.constant 0 : index
    %c0_3 = arith.constant 0 : index
    %1 = vector.load %arg1[%c0_1, %c0_2, %c0_3] : memref<1x8x32xf32, #tpu.memory_space<vmem>>, vector<1x8x32xf32>
    %2 = vector.shape_cast %1 : vector<1x8x32xf32> to vector<8x32xf32>
    %c0_4 = arith.constant 0 : index
    %c0_5 = arith.constant 0 : index
    %c0_6 = arith.constant 0 : index
    %3 = vector.load %arg2[%c0_4, %c0_5, %c0_6] : memref<1x8x32xf32, #tpu.memory_space<vmem>>, vector<1x8x32xf32>
    %4 = vector.shape_cast %3 : vector<1x8x32xf32> to vector<8x32xf32>
    %cst = arith.constant dense<0.000000e+00> : vector<8x32xf32>
    %5 = tpu.matmul %4, %0, %cst {dimension_numbers = #tpu.dot_dimension_numbers<[1], [0], [0], [1], [0, 0, 1, 1], [], []>} : vector<8x32xf32>, vector<32x32xf32>, vector<8x32xf32> -> vector<8x32xf32>
    %cst_7 = arith.constant dense<0.000000e+00> : vector<8x8xf32>
    %6 = tpu.matmul %5, %2, %cst_7 {dimension_numbers = #tpu.dot_dimension_numbers<[1], [1], [0], [0], [0, 0, 1, 0], [], []>} : vector<8x32xf32>, vector<8x32xf32>, vector<8x8xf32> -> vector<8x8xf32>
    %cst_8 = arith.constant dense<0xFF800000> : vector<8xf32>
    %7 = vector.multi_reduction <maximumf>, %6, %cst_8 [1] : vector<8x8xf32> to vector<8xf32>
    %8 = vector.shape_cast %7 : vector<8xf32> to vector<8x1xf32>
    %9 = vector.broadcast %8 : vector<8x1xf32> to vector<8x8xf32>
    %10 = arith.subf %6, %9 : vector<8x8xf32>
    %11 = math.exp %10 : vector<8x8xf32>
    %cst_9 = arith.constant dense<0.000000e+00> : vector<8xf32>
    %12 = vector.multi_reduction <add>, %11, %cst_9 [1] : vector<8x8xf32> to vector<8xf32>
    %13 = vector.shape_cast %12 : vector<8xf32> to vector<8x1xf32>
    %14 = tpu.reciprocal %13 {approx = true} : vector<8x1xf32> -> vector<8x1xf32>
    %15 = arith.mulf %13, %14 : vector<8x1xf32>
    %cst_10 = arith.constant 2.000000e+00 : f32
    %16 = vector.broadcast %cst_10 : f32 to vector<8x1xf32>
    %17 = arith.subf %16, %15 : vector<8x1xf32>
    %18 = arith.mulf %14, %17 : vector<8x1xf32>
    %19 = vector.broadcast %18 : vector<8x1xf32> to vector<8x8xf32>
    %20 = arith.mulf %11, %19 : vector<8x8xf32>
    %cst_11 = arith.constant dense<0.000000e+00> : vector<8x32xf32>
    %21 = tpu.matmul %20, %2, %cst_11 {dimension_numbers = #tpu.dot_dimension_numbers<[1], [0], [0], [1], [0, 0, 1, 1], [], []>} : vector<8x8xf32>, vector<8x32xf32>, vector<8x32xf32> -> vector<8x32xf32>
    %c0_12 = arith.constant 0 : index
    %c0_13 = arith.constant 0 : index
    %c0_14 = arith.constant 0 : index
    %22 = vector.load %arg4[%c0_12, %c0_13, %c0_14] : memref<1x8x32xf32, #tpu.memory_space<vmem>>, vector<1x8x32xf32>
    %23 = vector.shape_cast %22 : vector<1x8x32xf32> to vector<8x32xf32>
    %24 = vector.shape_cast %21 : vector<8x32xf32> to vector<1x8x32xf32>
    tpu.vector_store %arg4[%c0_12, %c0_13, %c0_14], %24 {strides = array<i32>} : memref<1x8x32xf32, #tpu.memory_space<vmem>>, vector<1x8x32xf32>,
    %c0_15 = arith.constant 0 : index
    %c0_16 = arith.constant 0 : index
    %c0_17 = arith.constant 0 : index
    %25 = vector.load %arg5[%c0_15, %c0_16, %c0_17] : memref<1x8x8xf32, #tpu.memory_space<vmem>>, vector<1x8x8xf32>
    %26 = vector.shape_cast %25 : vector<1x8x8xf32> to vector<8x8xf32>
    %27 = vector.shape_cast %20 : vector<8x8xf32> to vector<1x8x8xf32>
    tpu.vector_store %arg5[%c0_15, %c0_16, %c0_17], %27 {strides = array<i32>} : memref<1x8x8xf32, #tpu.memory_space<vmem>>, vector<1x8x8xf32>,
    return
  }
  func.func @transform_0(%arg0: i32) -> (i32, i32, i32) {
    %c0_i32 = arith.constant 0 : i32
    %c0_i32_0 = arith.constant 0 : i32
    %c0_i32_1 = arith.constant 0 : i32
    return %arg0, %c0_i32, %c0_i32_0 : i32, i32, i32
  }
  func.func @transform_1(%arg0: i32) -> (i32, i32, i32) {
    %c0_i32 = arith.constant 0 : i32
    %c0_i32_0 = arith.constant 0 : i32
    %c0_i32_1 = arith.constant 0 : i32
    return %arg0, %c0_i32, %c0_i32_0 : i32, i32, i32
  }
  func.func @transform_2(%arg0: i32) -> (i32, i32) {
    %c0_i32 = arith.constant 0 : i32
    %c0_i32_0 = arith.constant 0 : i32
    %c0_i32_1 = arith.constant 0 : i32
    return %c0_i32, %c0_i32_0 : i32, i32
  }
  func.func @transform_3(%arg0: i32) -> (i32, i32, i32) {
    %c0_i32 = arith.constant 0 : i32
    %c0_i32_0 = arith.constant 0 : i32
    %c0_i32_1 = arith.constant 0 : i32
    return %arg0, %c0_i32, %c0_i32_0 : i32, i32, i32
  }
  func.func @transform_4(%arg0: i32) -> (i32, i32, i32) {
    %c0_i32 = arith.constant 0 : i32
    %c0_i32_0 = arith.constant 0 : i32
    %c0_i32_1 = arith.constant 0 : i32
    return %arg0, %c0_i32, %c0_i32_0 : i32, i32, i32
  }
}

</mosaic_0001>

<llo_original>
// kernel: tpu_custom_call.1
$region0: #{tpu_custom_call.1}
  #allocation0 [shape = 'u32[]', space=smem, size = 0x4, offset = 0x4, fixed_abs, tag = 'smem constant byte address 0x4 - core index']
  #allocation1 [shape = 'u32[144,128]{1,0:T(1,128)}', space=vmem, size = 0x12000, scoped, tag = 'internal scratch']
  %s0 = inlined_call_operand.hbm [shape: f32[2,8,32], index: 0, kind: input, shape index: {}]
  %s1 = inlined_call_operand.hbm [shape: f32[2,8,32], index: 1, kind: input, shape index: {}]
  %s2 = inlined_call_operand.hbm [shape: f32[32,32], index: 2, kind: input, shape index: {}]
  %s3 = inlined_call_operand.hbm [shape: f32[2,8,32], index: 3, kind: output, shape index: {0}]
  %s4 = inlined_call_operand.hbm [shape: f32[2,8,8], index: 4, kind: output, shape index: {1}]
  %5 = xla_tuple %s3, %s4
  %s6 = sld [smem:[#allocation0]]
  $region65: #{tpu_custom_call.1} parent=0
    _
  %s8 = ssub.s32 1, %s6
  %s9 = scalar_select 0, %s8, %s6
  $region1: #{tpu_custom_call.1} parent=0
    #allocation2 [shape = 'u8[8192]{0}', space=vmem, size = 0x2000, scoped, tag = 'input window, operand 0']
    #allocation3 [shape = 's32[2]{0}', space=sflag, size = 0x8, scoped, tag = 'scoped memory for tpu_custom_call.1']
    #allocation4 [shape = 's32[2]{0}', space=sflag, size = 0x8, scoped, tag = 'scoped memory for tpu_custom_call.1']
    #allocation5 [shape = 'u8[8192]{0}', space=vmem, size = 0x2000, scoped, tag = 'input window, operand 1']
    #allocation6 [shape = 's32[2]{0}', space=sflag, size = 0x8, scoped, tag = 'scoped memory for tpu_custom_call.1']
    #allocation7 [shape = 'u8[16384]{0}', space=vmem, size = 0x4000, scoped, tag = 'input window, operand 2, single buffered']
    #allocation8 [shape = 'u8[8192]{0}', space=vmem, size = 0x2000, scoped, tag = 'output window, operand 0']
    #allocation9 [shape = 'u8[8192]{0}', space=vmem, size = 0x2000, scoped, tag = 'output window, operand 1']
    #allocation10 [shape = 's32[2]{0}', space=sflag, size = 0x8, scoped, tag = 'scoped memory for tpu_custom_call.1']
    %10 = vsyncpa [#allocation3], 0
    %s11 = scalar_lea.sflag [#allocation3], 1
    %12 = vsyncpa %s11, 0
    %13 = vsyncpa [#allocation6], 0
    %s14 = scalar_lea.sflag [#allocation6], 1
    %15 = vsyncpa %s14, 0
    %16 = vsyncpa [#allocation4], 0
    %s17 = scalar_lea.sflag [#allocation4], 1
    %18 = vsyncpa %s17, 0
    %19 = vsyncpa [#allocation10], 0
    %s20 = scalar_lea.sflag [#allocation10], 1
    %21 = vsyncpa %s20, 0
    loop: start=0, step=1, limit=4
    $region2: #{tpu_custom_call.1} parent=1 // loop_pre_header
      _
    $region3: #{tpu_custom_call.1} parent=1 // loop_header
      %s23 = sphi 0, %s27
      %p24 = scmp.ge.s32.totalorder %s23, 4
      %s33 = sphi 0, %s35
      %s36 = sphi 0, %s33
      %s37 = sphi 0, %s36
      %s53 = sphi 0, %s37
      %s59 = sphi 0, %s61
      %s62 = sphi 0, %s59
      %s63 = sphi 0, %s62
      %s79 = sphi 0, %s63
      %s83 = sphi 0, %s83
      %s85 = sphi 0, %s83
      %s86 = sphi 0, %s85
      %s100 = sphi 0, %s86
      %s106 = sphi 0, %s108
      %s109 = sphi 0, %s106
      %s110 = sphi 0, %s109
      %s126 = sphi 0, %s110
      %s132 = sphi 0, %s134
      %s135 = sphi 0, %s132
      %s136 = sphi 0, %s135
      %s152 = sphi 0, %s136
    $region4: #{tpu_custom_call.1} parent=1 // loop_header_branch
      %26 = sbr.rel (%p24) target = $region8
    $region5: #{tpu_custom_call.1} parent=1 // loop_body
      %s28 = ssub.s32 %s23, 1
      %s29 = ssub.s32 %s23, 2
      %s30 = sadd.s32 %s23, 1
      %s31 = ssub.s32 %s23, %s30
      %p32 = scmp.eq.s32.totalorder %s31, 0
      %s34 = sadd.s32 %s33, 1
      %s35 = scalar_select %p32, %s33, %s34
      %p38 = pneg %p32
      %p39 = scmp.eq.s32.totalorder %s23, 1
      %p40 = por %p38, %p39
      %p41 = scmp.ne.s32.totalorder %s33, %s36
      %p42 = scmp.eq.s32.totalorder %s23, 0
      %p43 = por %p41, %p42
      %p44 = scmp.ne.s32.totalorder %s33, %s36
      %p45 = scmp.eq.s32.totalorder %s28, 1
      %p46 = por %p44, %p45
      %p47 = scmp.ne.s32.totalorder %s36, %s37
      %p48 = scmp.eq.s32.totalorder %s28, 0
      %p49 = por %p47, %p48
      %p50 = scmp.ne.s32.totalorder %s36, %s37
      %p51 = scmp.eq.s32.totalorder %s29, 1
      %p52 = por %p50, %p51
      %p54 = scmp.ne.s32.totalorder %s37, %s53
      %p55 = scmp.eq.s32.totalorder %s29, 0
      %p56 = por %p54, %p55
      %s57 = ssub.s32 %s23, %s30
      %p58 = scmp.eq.s32.totalorder %s57, 0
      %s60 = sadd.s32 %s59, 1
      %s61 = scalar_select %p58, %s59, %s60
      %p64 = pneg %p58
      %p65 = scmp.eq.s32.totalorder %s23, 1
      %p66 = por %p64, %p65
      %p67 = scmp.ne.s32.totalorder %s59, %s62
      %p68 = scmp.eq.s32.totalorder %s23, 0
      %p69 = por %p67, %p68
      %p70 = scmp.ne.s32.totalorder %s59, %s62
      %p71 = scmp.eq.s32.totalorder %s28, 1
      %p72 = por %p70, %p71
      %p73 = scmp.ne.s32.totalorder %s62, %s63
      %p74 = scmp.eq.s32.totalorder %s28, 0
      %p75 = por %p73, %p74
      %p76 = scmp.ne.s32.totalorder %s62, %s63
      %p77 = scmp.eq.s32.totalorder %s29, 1
      %p78 = por %p76, %p77
      %p80 = scmp.ne.s32.totalorder %s63, %s79
      %p81 = scmp.eq.s32.totalorder %s29, 0
      %p82 = por %p80, %p81
      %s84 = sadd.s32 %s83, 1
      %p87 = scmp.eq.s32.totalorder %s23, 1
      %p88 = scmp.ne.s32.totalorder %s83, %s85
      %p89 = scmp.eq.s32.totalorder %s23, 0
      %p90 = por %p88, %p89
      %p91 = scmp.ne.s32.totalorder %s83, %s85
      %p92 = scmp.eq.s32.totalorder %s28, 1
      %p93 = por %p91, %p92
      %p94 = scmp.ne.s32.totalorder %s85, %s86
      %p95 = scmp.eq.s32.totalorder %s28, 0
      %p96 = por %p94, %p95
      %p97 = scmp.ne.s32.totalorder %s85, %s86
      %p98 = scmp.eq.s32.totalorder %s29, 1
      %p99 = por %p97, %p98
      %p101 = scmp.ne.s32.totalorder %s86, %s100
      %p102 = scmp.eq.s32.totalorder %s29, 0
      %p103 = por %p101, %p102
      %s104 = ssub.s32 %s23, %s30
      %p105 = scmp.eq.s32.totalorder %s104, 0
      %s107 = sadd.s32 %s106, 1
      %s108 = scalar_select %p105, %s106, %s107
      %p111 = pneg %p105
      %p112 = scmp.eq.s32.totalorder %s23, 1
      %p113 = por %p111, %p112
      %p114 = scmp.ne.s32.totalorder %s106, %s109
      %p115 = scmp.eq.s32.totalorder %s23, 0
      %p116 = por %p114, %p115
      %p117 = scmp.ne.s32.totalorder %s106, %s109
      %p118 = scmp.eq.s32.totalorder %s28, 1
      %p119 = por %p117, %p118
      %p120 = scmp.ne.s32.totalorder %s109, %s110
      %p121 = scmp.eq.s32.totalorder %s28, 0
      %p122 = por %p120, %p121
      %p123 = scmp.ne.s32.totalorder %s109, %s110
      %p124 = scmp.eq.s32.totalorder %s29, 1
      %p125 = por %p123, %p124
      %p127 = scmp.ne.s32.totalorder %s110, %s126
      %p128 = scmp.eq.s32.totalorder %s29, 0
      %p129 = por %p127, %p128
      %s130 = ssub.s32 %s23, %s30
      %p131 = scmp.eq.s32.totalorder %s130, 0
      %s133 = sadd.s32 %s132, 1
      %s134 = scalar_select %p131, %s132, %s133
      %p137 = pneg %p131
      %p138 = scmp.eq.s32.totalorder %s23, 1
      %p139 = por %p137, %p138
      %p140 = scmp.ne.s32.totalorder %s132, %s135
      %p141 = scmp.eq.s32.totalorder %s23, 0
      %p142 = por %p140, %p141
      %p143 = scmp.ne.s32.totalorder %s132, %s135
      %p144 = scmp.eq.s32.totalorder %s28, 1
      %p145 = por %p143, %p144
      %p146 = scmp.ne.s32.totalorder %s135, %s136
      %p147 = scmp.eq.s32.totalorder %s28, 0
      %p148 = por %p146, %p147
      %p149 = scmp.ne.s32.totalorder %s135, %s136
      %p150 = scmp.eq.s32.totalorder %s29, 1
      %p151 = por %p149, %p150
      %p153 = scmp.ne.s32.totalorder %s136, %s152
      %p154 = scmp.eq.s32.totalorder %s29, 0
      %p155 = por %p153, %p154
      %p156 = scmp.le.s32.totalorder 1, %s23
      %p157 = scmp.lt.s32.totalorder %s23, 3
      %p158 = pnand %p156, %p157
      %p159 = pneg %p158
      // Predicated region
      $region9: #{tpu_custom_call.1} parent=5 // pred_check
        _
      $region10: #{tpu_custom_call.1} parent=5 // pred_check_branch
        %161 = sbr.rel (%p158) target = $region12
      $region11: #{tpu_custom_call.1} parent=5 // pred_region
        %s162 = ssub.s32 %s23, 1
        // Predicated region
        $region13: #{tpu_custom_call.1} parent=11 // pred_check
          %p163 = pneg %p96
        $region14: #{tpu_custom_call.1} parent=11 // pred_check_branch
          %165 = sbr.rel (%p163) target = $region16
        $region15: #{tpu_custom_call.1} parent=11 // pred_region
          %s167 = ssub.s32 512, 512
          %168 = vsyncadd [#allocation6], %s167
          %s169 = sshll.u32 [#allocation7], 4
          %s170 = int_to_ptr.vmem [resolvable:$true] %s169
          %175 = dma.hbm_to_vmem [thread:$0]  %s2, 512, %s170, [#allocation6], 128, 128, 8
        $region16: #{tpu_custom_call.1} parent=11 // pred_fallthru
          _
      $region12: #{tpu_custom_call.1} parent=5 // pred_fallthru
        _
      %p176 = scmp.lt.s32.totalorder %s23, 2
      // Predicated region
      $region17: #{tpu_custom_call.1} parent=5 // pred_check
        %p177 = pneg %p176
      $region18: #{tpu_custom_call.1} parent=5 // pred_check_branch
        %179 = sbr.rel (%p177) target = $region20
      $region19: #{tpu_custom_call.1} parent=5 // pred_region
        // Predicated region
        $region21: #{tpu_custom_call.1} parent=19 // pred_check
          %p180 = pneg %p43
        $region22: #{tpu_custom_call.1} parent=19 // pred_check_branch
          %182 = sbr.rel (%p180) target = $region24
        $region23: #{tpu_custom_call.1} parent=19 // pred_region
          %s183 = sand.u32 %s33, 1
          %s184 = scalar_lea.sflag [#allocation3], %s183
          %s185 = sand.u32 %s33, 1
          %s186 = smul.addr %s185, 8
          %s187 = scalar_lea.vmem [#allocation2], %s186
          %s189 = ssub.s32 128, 128
          %190 = vsyncadd %s184, %s189
          %s191 = smul.addr %s23, 128
          %s192 = scalar_lea.hbm %s0, %s191
          %s194 = sshll.u32 %s187, 4
          %s195 = int_to_ptr.vmem [resolvable:$true] %s194
          %197 = dma.hbm_to_vmem [thread:$0]  %s192, 128, %s195, %s184
        $region24: #{tpu_custom_call.1} parent=19 // pred_fallthru
          _
        // Predicated region
        $region25: #{tpu_custom_call.1} parent=19 // pred_check
          %p198 = pneg %p69
        $region26: #{tpu_custom_call.1} parent=19 // pred_check_branch
          %200 = sbr.rel (%p198) target = $region28
        $region27: #{tpu_custom_call.1} parent=19 // pred_region
          %s201 = sand.u32 %s23, 1
          %s202 = scalar_lea.sflag [#allocation6], %s201
          %s203 = sand.u32 %s59, 1
          %s204 = smul.addr %s203, 8
          %s205 = scalar_lea.vmem [#allocation5], %s204
          %s207 = ssub.s32 128, 128
          %208 = vsyncadd %s202, %s207
          %s209 = smul.addr %s23, 128
          %s210 = scalar_lea.hbm %s1, %s209
          %s212 = sshll.u32 %s205, 4
          %s213 = int_to_ptr.vmem [resolvable:$true] %s212
          %215 = dma.hbm_to_vmem [thread:$0]  %s210, 128, %s213, %s202
        $region28: #{tpu_custom_call.1} parent=19 // pred_fallthru
          _
      $region20: #{tpu_custom_call.1} parent=5 // pred_fallthru
        _
      %p216 = scmp.le.s32.totalorder 1, %s23
      %p217 = scmp.lt.s32.totalorder %s23, 3
      %p218 = pnand %p216, %p217
      %p219 = pneg %p218
      // Predicated region
      $region29: #{tpu_custom_call.1} parent=5 // pred_check
        _
      $region30: #{tpu_custom_call.1} parent=5 // pred_check_branch
        %221 = sbr.rel (%p218) target = $region32
      $region31: #{tpu_custom_call.1} parent=5 // pred_region
        %s222 = ssub.s32 %s23, 1
        %s223 = sand.u32 %s36, 1
        %s224 = scalar_lea.sflag [#allocation3], %s223
        %s225 = sand.u32 %s36, 1
        %s226 = smul.addr %s225, 8
        %s227 = scalar_lea.vmem [#allocation2], %s226
        // Predicated region
        $region33: #{tpu_custom_call.1} parent=31 // pred_check
          %p228 = pneg %p49
        $region34: #{tpu_custom_call.1} parent=31 // pred_check_branch
          %230 = sbr.rel (%p228) target = $region36
        $region35: #{tpu_custom_call.1} parent=31 // pred_region
          %231 = dma.done %s224, 128
        $region36: #{tpu_custom_call.1} parent=31 // pred_fallthru
          _
        %s232 = sand.u32 %s28, 1
        %s233 = scalar_lea.sflag [#allocation6], %s232
        %s234 = sand.u32 %s62, 1
        %s235 = smul.addr %s234, 8
        %s236 = scalar_lea.vmem [#allocation5], %s235
        // Predicated region
        $region37: #{tpu_custom_call.1} parent=31 // pred_check
          %p237 = pneg %p75
        $region38: #{tpu_custom_call.1} parent=31 // pred_check_branch
          %239 = sbr.rel (%p237) target = $region40
        $region39: #{tpu_custom_call.1} parent=31 // pred_region
          %240 = dma.done %s233, 128
        $region40: #{tpu_custom_call.1} parent=31 // pred_fallthru
          _
        // Predicated region
        $region41: #{tpu_custom_call.1} parent=31 // pred_check
          %p241 = pneg %p96
        $region42: #{tpu_custom_call.1} parent=31 // pred_check_branch
          %243 = sbr.rel (%p241) target = $region44
        $region43: #{tpu_custom_call.1} parent=31 // pred_region
          %244 = dma.done [#allocation6], 512
        $region44: #{tpu_custom_call.1} parent=31 // pred_fallthru
          _
        %s245 = sand.u32 %s36, 1
        %s246 = scalar_lea.sflag [#allocation3], %s245
        %s247 = sand.u32 %s36, 1
        %s248 = smul.addr %s247, 8
        %s249 = scalar_lea.vmem [#allocation2], %s248
        %p250 = pneg %p49
        %p251 = pneg %p46
        %s252 = sand.u32 %s28, 1
        %s253 = scalar_lea.sflag [#allocation6], %s252
        %s254 = sand.u32 %s62, 1
        %s255 = smul.addr %s254, 8
        %s256 = scalar_lea.vmem [#allocation5], %s255
        %p257 = pneg %p75
        %p258 = pneg %p72
        %p259 = pneg %p96
        %p260 = pneg %p93
        %p261 = pneg %p122
        %p262 = pneg %p119
        %s263 = sand.u32 %s109, 1
        %s264 = scalar_lea.sflag [#allocation4], %s263
        %s265 = sand.u32 %s109, 1
        %s266 = smul.addr %s265, 8
        %s267 = scalar_lea.vmem [#allocation8], %s266
        %p268 = pneg %p148
        %p269 = pneg %p145
        %s270 = sand.u32 %s135, 1
        %s271 = scalar_lea.sflag [#allocation10], %s270
        %s272 = sand.u32 %s135, 1
        %s273 = smul.addr %s272, 8
        %s274 = scalar_lea.vmem [#allocation9], %s273
        %v275 = vld [vmem:[#allocation7] sm:$0xff]
        %v276 = vld [vmem:[#allocation7 + $0x8] sm:$0xff]
        %v277 = vld [vmem:[#allocation7 + $0x10] sm:$0xff]
        %v278 = vld [vmem:[#allocation7 + $0x18] sm:$0xff]
        %v279 = vld [vmem:[%s227] sm:$0xff]
        %v280 = vld [vmem:[%s236] sm:$0xff]
        %vm281 = vcmask 261120
        %v283 = vsel %vm281, %v280, 0
        %285 = vmatprep.subr.mxu0 0.0
        %286 = vmatpush1.msra.mxu0 0.0
        %287 = vmatprep.subr.mxu0 0.0
        %288 = vmatpush1.msra.mxu0 0.0
        %289 = vmatprep.subr.mxu0 0.0
        %290 = vmatpush1.msra.mxu0 0.0
        %291 = vmatprep.subr.mxu0 0.0
        %292 = vmatpush1.msra.mxu0 0.0
        %293 = vmatprep.subr.mxu0 0.0
        %294 = vmatpush1.msra.mxu0 0.0
        %295 = vmatprep.subr.mxu0 0.0
        %296 = vmatpush1.msra.mxu0 0.0
        %297 = vmatprep.subr.mxu0 0.0
        %298 = vmatpush1.msra.mxu0 0.0
        %299 = vmatprep.subr.mxu0 0.0
        %300 = vmatpush1.msra.mxu0 0.0
        %301 = vmatprep.subr.mxu0 0.0
        %302 = vmatpush1.msra.mxu0 0.0
        %303 = vmatprep.subr.mxu0 0.0
        %304 = vmatpush1.msra.mxu0 0.0
        %305 = vmatprep.subr.mxu0 0.0
        %306 = vmatpush1.msra.mxu0 0.0
        %307 = vmatprep.subr.mxu0 0.0
        %308 = vmatpush1.msra.mxu0 0.0
        %309 = vmatprep.subr.mxu0 0.0
        %310 = vmatpush1.msra.mxu0 %v278
        %311 = vmatprep.subr.mxu0 0.0
        %312 = vmatpush1.msra.mxu0 %v277
        %313 = vmatprep.subr.mxu0 0.0
        %314 = vmatpush1.msra.mxu0 %v276
        %315 = vmatprep.subr.mxu0 0.0
        %316 = vmatpush1.msra.mxu0 %v275
        %317 = vmatprep.subr.mxu0 0.0
        %318 = vmatpush2.msra.mxu0 0.0
        %319 = vmatprep.subr.mxu0 0.0
        %320 = vmatpush2.msra.mxu0 0.0
        %321 = vmatprep.subr.mxu0 0.0
        %322 = vmatpush2.msra.mxu0 0.0
        %323 = vmatprep.subr.mxu0 0.0
        %324 = vmatpush2.msra.mxu0 0.0
        %325 = vmatprep.subr.mxu0 0.0
        %326 = vmatpush2.msra.mxu0 0.0
        %327 = vmatprep.subr.mxu0 0.0
        %328 = vmatpush2.msra.mxu0 0.0
        %329 = vmatprep.subr.mxu0 0.0
        %330 = vmatpush2.msra.mxu0 0.0
        %331 = vmatprep.subr.mxu0 0.0
        %332 = vmatpush2.msra.mxu0 0.0
        %333 = vmatprep.subr.mxu0 0.0
        %334 = vmatpush2.msra.mxu0 0.0
        %335 = vmatprep.subr.mxu0 0.0
        %336 = vmatpush2.msra.mxu0 0.0
        %337 = vmatprep.subr.mxu0 0.0
        %338 = vmatpush2.msra.mxu0 0.0
        %339 = vmatprep.subr.mxu0 0.0
        %340 = vmatpush2.msra.mxu0 0.0
        %341 = vmatprep.subr.mxu0 0.0
        %342 = vmatpush2.msra.mxu0 0.0
        %343 = vmatprep.subr.mxu0 0.0
        %344 = vmatpush2.msra.mxu0 0.0
        %345 = vmatprep.subr.mxu0 0.0
        %346 = vmatpush2.msra.mxu0 0.0
        %347 = vmatprep.subr.mxu0 0.0
        %348 = vmatpush2.msra.mxu0 0.0
        %349 = vmatprep.mubr.f32.mxu0 0.0
        %350 = vmatmul.mubr.f32.gmra.mxu0 %v283
        %v351 = vpop.f32.mrf.mxu0
        %v352 = vadd.f32 0.0, %v351
        %v353 = vpop.f32.mrf.mxu0
        %354 = vdwg.mxu0
        %v356 = vsel %vm281, %v352, 0
        %v359 = vsel %vm281, %v279, 0
        %361 = vmatprep.subr.mxu0 0.0
        %362 = vmatpush1.xpose.msra.mxu0 0.0
        %363 = vmatprep.subr.mxu0 0.0
        %364 = vmatpush1.xpose.msra.mxu0 0.0
        %365 = vmatprep.subr.mxu0 0.0
        %366 = vmatpush1.xpose.msra.mxu0 0.0
        %367 = vmatprep.subr.mxu0 0.0
        %368 = vmatpush1.xpose.msra.mxu0 0.0
        %369 = vmatprep.subr.mxu0 0.0
        %370 = vmatpush1.xpose.msra.mxu0 0.0
        %371 = vmatprep.subr.mxu0 0.0
        %372 = vmatpush1.xpose.msra.mxu0 0.0
        %373 = vmatprep.subr.mxu0 0.0
        %374 = vmatpush1.xpose.msra.mxu0 0.0
        %375 = vmatprep.subr.mxu0 0.0
        %376 = vmatpush1.xpose.msra.mxu0 0.0
        %377 = vmatprep.subr.mxu0 0.0
        %378 = vmatpush1.xpose.msra.mxu0 0.0
        %379 = vmatprep.subr.mxu0 0.0
        %380 = vmatpush1.xpose.msra.mxu0 0.0
        %381 = vmatprep.subr.mxu0 0.0
        %382 = vmatpush1.xpose.msra.mxu0 0.0
        %383 = vmatprep.subr.mxu0 0.0
        %384 = vmatpush1.xpose.msra.mxu0 0.0
        %385 = vmatprep.subr.mxu0 0.0
        %386 = vmatpush1.xpose.msra.mxu0 0.0
        %387 = vmatprep.subr.mxu0 0.0
        %388 = vmatpush1.xpose.msra.mxu0 0.0
        %389 = vmatprep.subr.mxu0 0.0
        %390 = vmatpush1.xpose.msra.mxu0 0.0
        %391 = vmatprep.subr.mxu0 0.0
        %392 = vmatpush1.xpose.msra.mxu0 %v359
        %393 = vmatprep.subr.mxu0 0.0
        %394 = vmatpush2.xpose.msra.mxu0 0.0
        %395 = vmatprep.subr.mxu0 0.0
        %396 = vmatpush2.xpose.msra.mxu0 0.0
        %397 = vmatprep.subr.mxu0 0.0
        %398 = vmatpush2.xpose.msra.mxu0 0.0
        %399 = vmatprep.subr.mxu0 0.0
        %400 = vmatpush2.xpose.msra.mxu0 0.0
        %401 = vmatprep.subr.mxu0 0.0
        %402 = vmatpush2.xpose.msra.mxu0 0.0
        %403 = vmatprep.subr.mxu0 0.0
        %404 = vmatpush2.xpose.msra.mxu0 0.0
        %405 = vmatprep.subr.mxu0 0.0
        %406 = vmatpush2.xpose.msra.mxu0 0.0
        %407 = vmatprep.subr.mxu0 0.0
        %408 = vmatpush2.xpose.msra.mxu0 0.0
        %409 = vmatprep.subr.mxu0 0.0
        %410 = vmatpush2.xpose.msra.mxu0 0.0
        %411 = vmatprep.subr.mxu0 0.0
        %412 = vmatpush2.xpose.msra.mxu0 0.0
        %413 = vmatprep.subr.mxu0 0.0
        %414 = vmatpush2.xpose.msra.mxu0 0.0
        %415 = vmatprep.subr.mxu0 0.0
        %416 = vmatpush2.xpose.msra.mxu0 0.0
        %417 = vmatprep.subr.mxu0 0.0
        %418 = vmatpush2.xpose.msra.mxu0 0.0
        %419 = vmatprep.subr.mxu0 0.0
        %420 = vmatpush2.xpose.msra.mxu0 0.0
        %421 = vmatprep.subr.mxu0 0.0
        %422 = vmatpush2.xpose.msra.mxu0 0.0
        %423 = vmatprep.subr.mxu0 0.0
        %424 = vmatpush2.xpose.msra.mxu0 0.0
        %425 = vmatprep.mubr.f32.mxu0 0.0
        %426 = vmatmul.mubr.f32.gmra.mxu0 %v356
        %v427 = vpop.f32.mrf.mxu0
        %v428 = vadd.f32 0.0, %v427
        %v429 = vpop.f32.mrf.mxu0
        %430 = vdwg.mxu0
        %vm431 = vcmask 64512
        %v432 = vsel %vm431, %v428, -inf
        %433 = vmax.xlane.f32.xlu0 %v432
        %v434 = vpop.xlane.xlu0 %433
        %v435 = vsub.f32 %v428, %v434
        %v436 = vmul.f32 %v435, 1.442695
        %v437 = vpow.pop %v436
        %v438 = vsel %vm431, %v437, 0.0
        %439 = vadd.xlane.f32.xlu0 %v438
        %v440 = vpop.xlane.xlu0 %439
        %v441 = vrcp.pop %v440
        %v442 = vmul.f32 %v440, %v441
        %v443 = vsub.f32 2.0, %v442
        %v444 = vmul.f32 %v441, %v443
        %v445 = vmul.f32 %v437, %v444
        %v447 = vsel %vm431, %v445, 0
        %449 = vmatprep.subr.mxu0 0.0
        %450 = vmatpush1.msra.mxu0 0.0
        %451 = vmatprep.subr.mxu0 0.0
        %452 = vmatpush1.msra.mxu0 0.0
        %453 = vmatprep.subr.mxu0 0.0
        %454 = vmatpush1.msra.mxu0 0.0
        %455 = vmatprep.subr.mxu0 0.0
        %456 = vmatpush1.msra.mxu0 0.0
        %457 = vmatprep.subr.mxu0 0.0
        %458 = vmatpush1.msra.mxu0 0.0
        %459 = vmatprep.subr.mxu0 0.0
        %460 = vmatpush1.msra.mxu0 0.0
        %461 = vmatprep.subr.mxu0 0.0
        %462 = vmatpush1.msra.mxu0 0.0
        %463 = vmatprep.subr.mxu0 0.0
        %464 = vmatpush1.msra.mxu0 0.0
        %465 = vmatprep.subr.mxu0 0.0
        %466 = vmatpush1.msra.mxu0 0.0
        %467 = vmatprep.subr.mxu0 0.0
        %468 = vmatpush1.msra.mxu0 0.0
        %469 = vmatprep.subr.mxu0 0.0
        %470 = vmatpush1.msra.mxu0 0.0
        %471 = vmatprep.subr.mxu0 0.0
        %472 = vmatpush1.msra.mxu0 0.0
        %473 = vmatprep.subr.mxu0 0.0
        %474 = vmatpush1.msra.mxu0 0.0
        %475 = vmatprep.subr.mxu0 0.0
        %476 = vmatpush1.msra.mxu0 0.0
        %477 = vmatprep.subr.mxu0 0.0
        %478 = vmatpush1.msra.mxu0 0.0
        %479 = vmatprep.subr.mxu0 0.0
        %480 = vmatpush1.msra.mxu0 %v279
        %481 = vmatprep.subr.mxu0 0.0
        %482 = vmatpush2.msra.mxu0 0.0
        %483 = vmatprep.subr.mxu0 0.0
        %484 = vmatpush2.msra.mxu0 0.0
        %485 = vmatprep.subr.mxu0 0.0
        %486 = vmatpush2.msra.mxu0 0.0
        %487 = vmatprep.subr.mxu0 0.0
        %488 = vmatpush2.msra.mxu0 0.0
        %489 = vmatprep.subr.mxu0 0.0
        %490 = vmatpush2.msra.mxu0 0.0
        %491 = vmatprep.subr.mxu0 0.0
        %492 = vmatpush2.msra.mxu0 0.0
        %493 = vmatprep.subr.mxu0 0.0
        %494 = vmatpush2.msra.mxu0 0.0
        %495 = vmatprep.subr.mxu0 0.0
        %496 = vmatpush2.msra.mxu0 0.0
        %497 = vmatprep.subr.mxu0 0.0
        %498 = vmatpush2.msra.mxu0 0.0
        %499 = vmatprep.subr.mxu0 0.0
        %500 = vmatpush2.msra.mxu0 0.0
        %501 = vmatprep.subr.mxu0 0.0
        %502 = vmatpush2.msra.mxu0 0.0
        %503 = vmatprep.subr.mxu0 0.0
        %504 = vmatpush2.msra.mxu0 0.0
        %505 = vmatprep.subr.mxu0 0.0
        %506 = vmatpush2.msra.mxu0 0.0
        %507 = vmatprep.subr.mxu0 0.0
        %508 = vmatpush2.msra.mxu0 0.0
        %509 = vmatprep.subr.mxu0 0.0
        %510 = vmatpush2.msra.mxu0 0.0
        %511 = vmatprep.subr.mxu0 0.0
        %512 = vmatpush2.msra.mxu0 0.0
        %513 = vmatprep.mubr.f32.mxu0 0.0
        %514 = vmatmul.mubr.f32.gmra.mxu0 %v447
        %v515 = vpop.f32.mrf.mxu0
        %v516 = vadd.f32 0.0, %v515
        %v517 = vpop.f32.mrf.mxu0
        %518 = vdwg.mxu0
        %519 = vst.msk [vmem:[%s267] sm:$0xff] %vm281, %v516
        %520 = vst.msk [vmem:[%s274] sm:$0xff] %vm431, %v445
        %s521 = sand.u32 %s109, 1
        %s522 = scalar_lea.sflag [#allocation4], %s521
        %s523 = sand.u32 %s109, 1
        %s524 = smul.addr %s523, 8
        %s525 = scalar_lea.vmem [#allocation8], %s524
        %s526 = sand.u32 %s135, 1
        %s527 = scalar_lea.sflag [#allocation10], %s526
        %s528 = sand.u32 %s135, 1
        %s529 = smul.addr %s528, 8
        %s530 = scalar_lea.vmem [#allocation9], %s529
        // Predicated region
        $region45: #{tpu_custom_call.1} parent=31 // pred_check
          %p531 = pneg %p119
        $region46: #{tpu_custom_call.1} parent=31 // pred_check_branch
          %533 = sbr.rel (%p531) target = $region48
        $region47: #{tpu_custom_call.1} parent=31 // pred_region
          %s535 = ssub.s32 128, 128
          %536 = vsyncadd %s522, %s535
          %s537 = smul.addr %s28, 128
          %s538 = scalar_lea.hbm %s3, %s537
          %s540 = sshll.u32 %s525, 4
          %s541 = int_to_ptr.vmem [resolvable:$true] %s540
          %543 = dma.vmem_to_hbm [thread:$0]  %s541, 128, %s538, %s522
        $region48: #{tpu_custom_call.1} parent=31 // pred_fallthru
          _
        // Predicated region
        $region49: #{tpu_custom_call.1} parent=31 // pred_check
          %p544 = pneg %p145
        $region50: #{tpu_custom_call.1} parent=31 // pred_check_branch
          %546 = sbr.rel (%p544) target = $region52
        $region51: #{tpu_custom_call.1} parent=31 // pred_region
          %s548 = ssub.s32 128, 128
          %549 = vsyncadd %s527, %s548
          %s550 = smul.addr %s28, 128
          %s551 = scalar_lea.hbm %s4, %s550
          %s553 = sshll.u32 %s530, 4
          %s554 = int_to_ptr.vmem [resolvable:$true] %s553
          %556 = dma.vmem_to_hbm [thread:$0]  %s554, 128, %s551, %s527
        $region52: #{tpu_custom_call.1} parent=31 // pred_fallthru
          _
      $region32: #{tpu_custom_call.1} parent=5 // pred_fallthru
        _
      %p557 = scmp.le.s32.totalorder 2, %s23
      // Predicated region
      $region53: #{tpu_custom_call.1} parent=5 // pred_check
        %p558 = pneg %p557
      $region54: #{tpu_custom_call.1} parent=5 // pred_check_branch
        %560 = sbr.rel (%p558) target = $region56
      $region55: #{tpu_custom_call.1} parent=5 // pred_region
        %s561 = ssub.s32 %s23, 2
        // Predicated region
        $region57: #{tpu_custom_call.1} parent=55 // pred_check
          %p562 = pneg %p125
        $region58: #{tpu_custom_call.1} parent=55 // pred_check_branch
          %564 = sbr.rel (%p562) target = $region60
        $region59: #{tpu_custom_call.1} parent=55 // pred_region
          %s565 = sand.u32 %s110, 1
          %s566 = scalar_lea.sflag [#allocation4], %s565
          %s567 = sand.u32 %s110, 1
          %s568 = smul.addr %s567, 8
          %s569 = scalar_lea.vmem [#allocation8], %s568
          %570 = dma.done %s566, 128
        $region60: #{tpu_custom_call.1} parent=55 // pred_fallthru
          _
        // Predicated region
        $region61: #{tpu_custom_call.1} parent=55 // pred_check
          %p571 = pneg %p151
        $region62: #{tpu_custom_call.1} parent=55 // pred_check_branch
          %573 = sbr.rel (%p571) target = $region64
        $region63: #{tpu_custom_call.1} parent=55 // pred_region
          %s574 = sand.u32 %s136, 1
          %s575 = scalar_lea.sflag [#allocation10], %s574
          %s576 = sand.u32 %s136, 1
          %s577 = smul.addr %s576, 8
          %s578 = scalar_lea.vmem [#allocation9], %s577
          %579 = dma.done %s575, 128
        $region64: #{tpu_custom_call.1} parent=55 // pred_fallthru
          _
      $region56: #{tpu_custom_call.1} parent=5 // pred_fallthru
        _
    $region6: #{tpu_custom_call.1} parent=1 // loop_footer
      %s27 = sadd.s32 1, %s23
    $region7: #{tpu_custom_call.1} parent=1 // loop_footer_branch
      %22 = sbr.rel target = $region3
    $region8: #{tpu_custom_call.1} parent=1 // loop_exit
      _
    %580 = vsyncpa [#allocation3], 1
    %s581 = scalar_lea.sflag [#allocation3], 1
    %582 = vsyncpa %s581, 1
    %583 = vsyncpa [#allocation6], 1
    %s584 = scalar_lea.sflag [#allocation6], 1
    %585 = vsyncpa %s584, 1
    %586 = vsyncpa [#allocation4], 1
    %s587 = scalar_lea.sflag [#allocation4], 1
    %588 = vsyncpa %s587, 1
    %589 = vsyncpa [#allocation10], 1
    %s590 = scalar_lea.sflag [#allocation10], 1
    %591 = vsyncpa %s590, 1

</llo_original>
